<compile_context>
chip_gen: v5e
topology: v5e:2x2
jax: 0.10.0
libtpu: 0.0.40
codegen_flags: <defaults>
</compile_context>

<pallas_src>
import functools

import jax
import jax.numpy as jnp
from jax.experimental import pallas as pl
from jax.experimental.pallas import tpu as pltpu

HIDDEN = 128
LANE = 128  # padded output / logit width (lane-dense, unmasked vst)


def actor_kernel(x_ref, w1_ref, b1_ref, w2_ref, b2_ref, w3_ref, b3_ref, out_ref):
    x = x_ref[...]                 # (TB, S)   f32
    w1 = w1_ref[...]               # (S, H)    f32
    state_dim = w1.shape[0]

    # ---- Layer 1 on the VPU: S (=4) broadcast FMAs; a K=4 MXU matmul would
    #      pay full weight-load / drain latency for ~3% MXU utilization.
    #      (Only worth it while state_dim is tiny; for larger state_dim pad K
    #      to 128 and use the MXU like layers 2/3.)
    h1 = x[:, 0:1] * w1[0:1, :]
    for k in range(1, state_dim):
        h1 = h1 + x[:, k:k + 1] * w1[k:k + 1, :]
    h1 = jnp.maximum(h1 + b1_ref[...], 0.0)               # (TB, H) f32

    mxu_dtype = w2_ref.dtype       # bf16 (native MXU dtype on v6e/v7x) or f32

    # ---- Layer 2: MXU matmul, f32 accumulation.
    h2 = jnp.dot(h1.astype(mxu_dtype), w2_ref[...],
                 preferred_element_type=jnp.float32)
    h2 = jnp.maximum(h2 + b2_ref[...], 0.0)                # (TB, H) f32

    # ---- Layer 3: MXU matmul into the lane-padded (TB, 128) logits slab.
    logits = jnp.dot(h2.astype(mxu_dtype), w3_ref[...],
                     preferred_element_type=jnp.float32)
    logits = logits + b3_ref[...]   # padded lanes carry a ~-inf (f32) bias

    # ---- Numerically stable softmax over the padded lane dim.  Padded lanes
    #      exp to exactly 0 after max-subtraction, so real lanes sum to 1.
    m = jnp.max(logits, axis=-1, keepdims=True)
    e = jnp.exp(logits - m)
    denom = jnp.sum(e, axis=-1, keepdims=True)
    out_ref[...] = (e / denom).astype(out_ref.dtype)       # exact normalization


def _round_up(x, m):
    return ((x + m - 1) // m) * m


def _pick_batch_tile(batch, block_batch):
    b8 = _round_up(batch, 8)
    tb = _round_up(min(block_batch, b8), 8)
    # Guarantee >= 2 grid steps whenever the batch allows it so the "parallel"
    # batch axis can shard across both v7x TensorCores (1 TC on v5e/v6e).
    if b8 // tb < 2 and b8 >= 16:
        tb = _round_up(pl.cdiv(b8, 2), 8)
    bp = _round_up(b8, tb)
    return tb, bp


def prepare_params(params, *, mxu_dtype=jnp.bfloat16):
    """One-time prep of raw f32 params for the kernel (NOT per forward call).

    - Pads w3/b3 out to the 128-lane slab (zero weight columns, -1e30 bias ->
      padded lanes get exactly 0 probability).
    - Casts the two 128x128 MXU weights to `mxu_dtype` (bf16 default: native
      MXU dtype on v6e/v7x, halves the resident weight footprint & DMA bytes).
      Pass mxu_dtype=jnp.float32 for bit-exact parity with an f32 reference.
    """
    w1, b1, w2, b2, w3, b3 = params
    action_dim = w3.shape[1]
    assert action_dim <= LANE, "action_dim > 128 needs a multi-slab output path"
    pad_a = LANE - action_dim
    w3_p = jnp.pad(w3, ((0, 0), (0, pad_a))).astype(mxu_dtype)
    b3_p = jnp.pad(b3, ((0, 0), (0, pad_a)),
                   constant_values=-1e30).astype(jnp.float32)
    prepared = (
        w1.astype(jnp.float32), b1.astype(jnp.float32),
        w2.astype(mxu_dtype), b2.astype(jnp.float32),
        w3_p, b3_p,
    )
    return prepared, action_dim


@functools.partial(
    jax.jit, static_argnames=("action_dim", "block_batch", "return_padded"))
def actor_forward(state, prepared_params, *, action_dim,
                  block_batch=1024, return_padded=False):
    """state: (B, state_dim) f32 -> (B, action_dim) f32 probabilities.

    block_batch: rows per grid step. 512-2048 keeps the pipeline near the HBM
    roofline. VMEM budget (lane-padded): ~2*(tb*128*4) state + 2*(tb*128*4)
    out + ~0.1 MiB weights -> < 5 MiB at tb=2048, safe on every generation's
    scoped default (incl. v7x's 64 MiB / 32 MiB default).

    return_padded=True skips the final HBM slice pass and returns the raw
    (Bp, 128) slab: lanes >= action_dim are exactly 0, rows >= B are padding.
    """
    w1, b1, w2, b2, w3_p, b3_p = prepared_params
    B, state_dim = state.shape

    tb, Bp = _pick_batch_tile(B, block_batch)
    if Bp != B:
        state = jnp.pad(state, ((0, Bp - B), (0, 0)))
    n_blocks = Bp // tb

    cost = pl.CostEstimate(
        flops=2 * Bp * (state_dim * HIDDEN + HIDDEN * HIDDEN + HIDDEN * LANE)
              + 6 * Bp * LANE,
        transcendentals=Bp * LANE,
        bytes_accessed=(Bp * state_dim + Bp * LANE) * 4
                       + sum(int(a.size) * a.dtype.itemsize
                             for a in (w1, b1, w2, b2, w3_p, b3_p)),
    )

    # Weights / biases: block index is always (0, 0) -> DMA'd once and VMEM
    # resident for the whole grid; a single pipeline buffer is enough.
    def resident(a):
        return pl.BlockSpec(a.shape, lambda i: (0, 0),
                            pipeline_mode=pl.Buffered(1))

    out_padded = pl.pallas_call(
        actor_kernel,
        out_shape=jax.ShapeDtypeStruct((Bp, LANE), jnp.float32),
        grid=(n_blocks,),
        in_specs=[
            pl.BlockSpec((tb, state_dim), lambda i: (i, 0)),   # batch tile
            resident(w1), resident(b1),
            resident(w2), resident(b2),
            resident(w3_p), resident(b3_p),
        ],
        out_specs=pl.BlockSpec((tb, LANE), lambda i: (i, 0)),
        compiler_params=pltpu.CompilerParams(
            dimension_semantics=("parallel",),   # batch tiles shard across TCs
        ),
        cost_estimate=cost,
    )(state, w1, b1, w2, b2, w3_p, b3_p)

    if return_padded:
        return out_padded
    # Extra HBM pass; large-batch consumers should use return_padded=True.
    return out_padded[:B, :action_dim]


def init_params(key, state_dim, action_dim, hidden=HIDDEN):
    """PyTorch nn.Linear default init (uniform +/- 1/sqrt(fan_in)).
    Weights stored as (in_features, out_features)."""
    ks = jax.random.split(key, 6)

    def layer(kw, kb, fan_in, fan_out):
        bound = 1.0 / (fan_in ** 0.5)
        w = jax.random.uniform(kw, (fan_in, fan_out), jnp.float32, -bound, bound)
        b = jax.random.uniform(kb, (1, fan_out), jnp.float32, -bound, bound)
        return w, b

    w1, b1 = layer(ks[0], ks[1], state_dim, hidden)
    w2, b2 = layer(ks[2], ks[3], hidden, hidden)
    w3, b3 = layer(ks[4], ks[5], hidden, action_dim)
    return (w1, b1, w2, b2, w3, b3)


if __name__ == "__main__":
    # CartPole-v1: state_dim = 4, action_dim = 2.  Batch of 200 rollout states
    # (not a tile multiple -> exercises batch padding; tile picker splits it
    # into 2 grid steps -> exercises the v7x two-TensorCore path).
    state_dim, action_dim, batch = 4, 2, 200

    key = jax.random.PRNGKey(0)
    k_params, k_state = jax.random.split(key)

    params = init_params(k_params, state_dim, action_dim)
    state = jax.random.normal(k_state, (batch, state_dim), dtype=jnp.float32)

    # One-time prep (lane padding + bf16 MXU weights), done outside the
    # rollout loop.
    prepared, a_dim = prepare_params(params, mxu_dtype=jnp.bfloat16)

    probs = actor_forward(state, prepared, action_dim=a_dim, block_batch=1024)
    probs = jax.block_until_ready(probs)

    # --- References --------------------------------------------------------
    w1, b1, w2, b2, w3, b3 = params
    h1 = jnp.maximum(state @ w1 + b1, 0.0)
    h2 = jnp.maximum(h1 @ w2 + b2, 0.0)
    ref_f32 = jax.nn.softmax(h2 @ w3 + b3, axis=-1)

    # Matched-precision reference (same bf16 matmul inputs as the kernel).
    bf = jnp.bfloat16
    h2_m = jnp.maximum(
        jnp.dot(h1.astype(bf), w2.astype(bf),
                preferred_element_type=jnp.float32) + b2, 0.0)
    ref_bf16 = jax.nn.softmax(
        jnp.dot(h2_m.astype(bf), w3.astype(bf),
                preferred_element_type=jnp.float32) + b3, axis=-1)

    assert probs.shape == (batch, action_dim)
    assert jnp.allclose(jnp.sum(probs, axis=-1), 1.0, atol=1e-5)
    assert jnp.allclose(probs, ref_bf16, atol=5e-3, rtol=5e-3)
    assert jnp.allclose(probs, ref_f32, atol=2e-2, rtol=2e-2)

    print("KERNEL_OK")
</pallas_src>

<mosaic_0001>
module attributes {stable_mosaic.version = 11 : i64} {
  func.func @actor_kernel(%arg0: i32, %arg1: memref<104x4xf32, #tpu.memory_space<vmem>>, %arg2: memref<4x128xf32, #tpu.memory_space<vmem>>, %arg3: memref<1x128xf32, #tpu.memory_space<vmem>>, %arg4: memref<128x128xbf16, #tpu.memory_space<vmem>>, %arg5: memref<1x128xf32, #tpu.memory_space<vmem>>, %arg6: memref<128x128xbf16, #tpu.memory_space<vmem>>, %arg7: memref<1x128xf32, #tpu.memory_space<vmem>>, %arg8: memref<104x128xf32, #tpu.memory_space<vmem>>) attributes {dimension_semantics = [#tpu.dimension_semantics<parallel>], iteration_bounds = array<i64: 2>, scalar_prefetch = 0 : i64, scratch_operands = 0 : i64, tpu.core_type = #tpu.core_type<tc>, window_params = [{transform_indices = @transform_0, window_bounds = array<i64: 104, 4>}, {pipeline_mode = #tpu.pipeline_mode<synchronous>, transform_indices = @transform_1, window_bounds = array<i64: 4, 128>}, {pipeline_mode = #tpu.pipeline_mode<synchronous>, transform_indices = @transform_2, window_bounds = array<i64: 1, 128>}, {pipeline_mode = #tpu.pipeline_mode<synchronous>, transform_indices = @transform_3, window_bounds = array<i64: 128, 128>}, {pipeline_mode = #tpu.pipeline_mode<synchronous>, transform_indices = @transform_4, window_bounds = array<i64: 1, 128>}, {pipeline_mode = #tpu.pipeline_mode<synchronous>, transform_indices = @transform_5, window_bounds = array<i64: 128, 128>}, {pipeline_mode = #tpu.pipeline_mode<synchronous>, transform_indices = @transform_6, window_bounds = array<i64: 1, 128>}, {transform_indices = @transform_7, window_bounds = array<i64: 104, 128>}]} {
    %c0 = arith.constant 0 : index
    %c0_0 = arith.constant 0 : index
    %0 = vector.load %arg1[%c0, %c0_0] : memref<104x4xf32, #tpu.memory_space<vmem>>, vector<104x4xf32>
    %c0_1 = arith.constant 0 : index
    %c0_2 = arith.constant 0 : index
    %1 = vector.load %arg2[%c0_1, %c0_2] : memref<4x128xf32, #tpu.memory_space<vmem>>, vector<4x128xf32>
    %2 = vector.extract_strided_slice %0 {offsets = [0, 0], sizes = [104, 1], strides = [1, 1]} : vector<104x4xf32> to vector<104x1xf32>
    %3 = vector.extract_strided_slice %1 {offsets = [0, 0], sizes = [1, 128], strides = [1, 1]} : vector<4x128xf32> to vector<1x128xf32>
    %4 = vector.broadcast %2 : vector<104x1xf32> to vector<104x128xf32>
    %5 = vector.broadcast %3 : vector<1x128xf32> to vector<104x128xf32>
    %6 = arith.mulf %4, %5 : vector<104x128xf32>
    %7 = vector.extract_strided_slice %0 {offsets = [0, 1], sizes = [104, 1], strides = [1, 1]} : vector<104x4xf32> to vector<104x1xf32>
    %8 = vector.extract_strided_slice %1 {offsets = [1, 0], sizes = [1, 128], strides = [1, 1]} : vector<4x128xf32> to vector<1x128xf32>
    %9 = vector.broadcast %7 : vector<104x1xf32> to vector<104x128xf32>
    %10 = vector.broadcast %8 : vector<1x128xf32> to vector<104x128xf32>
    %11 = arith.mulf %9, %10 : vector<104x128xf32>
    %12 = arith.addf %6, %11 : vector<104x128xf32>
    %13 = vector.extract_strided_slice %0 {offsets = [0, 2], sizes = [104, 1], strides = [1, 1]} : vector<104x4xf32> to vector<104x1xf32>
    %14 = vector.extract_strided_slice %1 {offsets = [2, 0], sizes = [1, 128], strides = [1, 1]} : vector<4x128xf32> to vector<1x128xf32>
    %15 = vector.broadcast %13 : vector<104x1xf32> to vector<104x128xf32>
    %16 = vector.broadcast %14 : vector<1x128xf32> to vector<104x128xf32>
    %17 = arith.mulf %15, %16 : vector<104x128xf32>
    %18 = arith.addf %12, %17 : vector<104x128xf32>
    %19 = vector.extract_strided_slice %0 {offsets = [0, 3], sizes = [104, 1], strides = [1, 1]} : vector<104x4xf32> to vector<104x1xf32>
    %20 = vector.extract_strided_slice %1 {offsets = [3, 0], sizes = [1, 128], strides = [1, 1]} : vector<4x128xf32> to vector<1x128xf32>
    %21 = vector.broadcast %19 : vector<104x1xf32> to vector<104x128xf32>
    %22 = vector.broadcast %20 : vector<1x128xf32> to vector<104x128xf32>
    %23 = arith.mulf %21, %22 : vector<104x128xf32>
    %24 = arith.addf %18, %23 : vector<104x128xf32>
    %c0_3 = arith.constant 0 : index
    %c0_4 = arith.constant 0 : index
    %25 = vector.load %arg3[%c0_3, %c0_4] : memref<1x128xf32, #tpu.memory_space<vmem>>, vector<1x128xf32>
    %26 = vector.broadcast %25 : vector<1x128xf32> to vector<104x128xf32>
    %27 = arith.addf %24, %26 : vector<104x128xf32>
    %cst = arith.constant 0.000000e+00 : f32
    %28 = vector.broadcast %cst : f32 to vector<104x128xf32>
    %29 = arith.maximumf %27, %28 : vector<104x128xf32>
    %30 = arith.truncf %29 : vector<104x128xf32> to vector<104x128xbf16>
    %c0_5 = arith.constant 0 : index
    %c0_6 = arith.constant 0 : index
    %31 = vector.load %arg4[%c0_5, %c0_6] : memref<128x128xbf16, #tpu.memory_space<vmem>>, vector<128x128xbf16>
    %cst_7 = arith.constant dense<0.000000e+00> : vector<104x128xf32>
    %32 = tpu.matmul %30, %31, %cst_7 {dimension_numbers = #tpu.dot_dimension_numbers<[1], [0], [0], [1], [0, 0, 1, 1], [], []>} : vector<104x128xbf16>, vector<128x128xbf16>, vector<104x128xf32> -> vector<104x128xf32>
    %c0_8 = arith.constant 0 : index
    %c0_9 = arith.constant 0 : index
    %33 = vector.load %arg5[%c0_8, %c0_9] : memref<1x128xf32, #tpu.memory_space<vmem>>, vector<1x128xf32>
    %34 = vector.broadcast %33 : vector<1x128xf32> to vector<104x128xf32>
    %35 = arith.addf %32, %34 : vector<104x128xf32>
    %cst_10 = arith.constant 0.000000e+00 : f32
    %36 = vector.broadcast %cst_10 : f32 to vector<104x128xf32>
    %37 = arith.maximumf %35, %36 : vector<104x128xf32>
    %38 = arith.truncf %37 : vector<104x128xf32> to vector<104x128xbf16>
    %c0_11 = arith.constant 0 : index
    %c0_12 = arith.constant 0 : index
    %39 = vector.load %arg6[%c0_11, %c0_12] : memref<128x128xbf16, #tpu.memory_space<vmem>>, vector<128x128xbf16>
    %cst_13 = arith.constant dense<0.000000e+00> : vector<104x128xf32>
    %40 = tpu.matmul %38, %39, %cst_13 {dimension_numbers = #tpu.dot_dimension_numbers<[1], [0], [0], [1], [0, 0, 1, 1], [], []>} : vector<104x128xbf16>, vector<128x128xbf16>, vector<104x128xf32> -> vector<104x128xf32>
    %c0_14 = arith.constant 0 : index
    %c0_15 = arith.constant 0 : index
    %41 = vector.load %arg7[%c0_14, %c0_15] : memref<1x128xf32, #tpu.memory_space<vmem>>, vector<1x128xf32>
    %42 = vector.broadcast %41 : vector<1x128xf32> to vector<104x128xf32>
    %43 = arith.addf %40, %42 : vector<104x128xf32>
    %cst_16 = arith.constant dense<0xFF800000> : vector<104xf32>
    %44 = vector.multi_reduction <maximumf>, %43, %cst_16 [1] : vector<104x128xf32> to vector<104xf32>
    %45 = vector.shape_cast %44 : vector<104xf32> to vector<104x1xf32>
    %46 = vector.broadcast %45 : vector<104x1xf32> to vector<104x128xf32>
    %47 = arith.subf %43, %46 : vector<104x128xf32>
    %48 = math.exp %47 : vector<104x128xf32>
    %cst_17 = arith.constant dense<0.000000e+00> : vector<104xf32>
    %49 = vector.multi_reduction <add>, %48, %cst_17 [1] : vector<104x128xf32> to vector<104xf32>
    %50 = vector.shape_cast %49 : vector<104xf32> to vector<104x1xf32>
    %51 = vector.broadcast %50 : vector<104x1xf32> to vector<104x128xf32>
    %52 = arith.divf %48, %51 : vector<104x128xf32>
    %c0_18 = arith.constant 0 : index
    %c0_19 = arith.constant 0 : index
    %53 = vector.load %arg8[%c0_18, %c0_19] : memref<104x128xf32, #tpu.memory_space<vmem>>, vector<104x128xf32>
    tpu.vector_store %arg8[%c0_18, %c0_19], %52 {strides = array<i32>} : memref<104x128xf32, #tpu.memory_space<vmem>>, vector<104x128xf32>,
    return
  }
  func.func @transform_0(%arg0: i32) -> (i32, i32) {
    %c0_i32 = arith.constant 0 : i32
    %c0_i32_0 = arith.constant 0 : i32
    return %arg0, %c0_i32 : i32, i32
  }
  func.func @transform_1(%arg0: i32) -> (i32, i32) {
    %c0_i32 = arith.constant 0 : i32
    %c0_i32_0 = arith.constant 0 : i32
    %c0_i32_1 = arith.constant 0 : i32
    return %c0_i32, %c0_i32_0 : i32, i32
  }
  func.func @transform_2(%arg0: i32) -> (i32, i32) {
    %c0_i32 = arith.constant 0 : i32
    %c0_i32_0 = arith.constant 0 : i32
    %c0_i32_1 = arith.constant 0 : i32
    return %c0_i32, %c0_i32_0 : i32, i32
  }
  func.func @transform_3(%arg0: i32) -> (i32, i32) {
    %c0_i32 = arith.constant 0 : i32
    %c0_i32_0 = arith.constant 0 : i32
    %c0_i32_1 = arith.constant 0 : i32
    return %c0_i32, %c0_i32_0 : i32, i32
  }
  func.func @transform_4(%arg0: i32) -> (i32, i32) {
    %c0_i32 = arith.constant 0 : i32
    %c0_i32_0 = arith.constant 0 : i32
    %c0_i32_1 = arith.constant 0 : i32
    return %c0_i32, %c0_i32_0 : i32, i32
  }
  func.func @transform_5(%arg0: i32) -> (i32, i32) {
    %c0_i32 = arith.constant 0 : i32
    %c0_i32_0 = arith.constant 0 : i32
    %c0_i32_1 = arith.constant 0 : i32
    return %c0_i32, %c0_i32_0 : i32, i32
  }
  func.func @transform_6(%arg0: i32) -> (i32, i32) {
    %c0_i32 = arith.constant 0 : i32
    %c0_i32_0 = arith.constant 0 : i32
    %c0_i32_1 = arith.constant 0 : i32
    return %c0_i32, %c0_i32_0 : i32, i32
  }
  func.func @transform_7(%arg0: i32) -> (i32, i32) {
    %c0_i32 = arith.constant 0 : i32
    %c0_i32_0 = arith.constant 0 : i32
    return %arg0, %c0_i32 : i32, i32
  }
}

</mosaic_0001>

<llo_original>
// kernel: actor_forward.1
$region0: #{actor_forward.1}
  #allocation0 [shape = 'u32[]', space=smem, size = 0x4, offset = 0x4, fixed_abs, tag = 'smem constant byte address 0x4 - core index']
  #allocation1 [shape = 'u32[72,128]{1,0:T(1,128)}', space=vmem, size = 0x9000, scoped, tag = 'internal scratch']
  %s0 = inlined_call_operand.vmem [shape: f32[208,4], index: 0, kind: input, shape index: {}]
  %s1 = inlined_call_operand.vmem [shape: f32[4,128], index: 1, kind: input, shape index: {}]
  %s2 = inlined_call_operand.vmem [shape: f32[1,128], index: 2, kind: input, shape index: {}]
  %s3 = inlined_call_operand.vmem [shape: bf16[128,128], index: 3, kind: input, shape index: {}]
  %s4 = inlined_call_operand.vmem [shape: f32[1,128], index: 4, kind: input, shape index: {}]
  %s5 = inlined_call_operand.vmem [shape: bf16[128,128], index: 5, kind: input, shape index: {}]
  %s6 = inlined_call_operand.vmem [shape: f32[1,128], index: 6, kind: input, shape index: {}]
  %s7 = inlined_call_operand.vmem [shape: f32[208,128], index: 7, kind: output, shape index: {}]
  %s8 = sld [smem:[#allocation0]]
  $region61: #{actor_forward.1} parent=0
    _
  %s10 = ssub.s32 1, %s8
  %s11 = scalar_select 0, %s10, %s8
  loop: start=0, step=1, limit=4
  $region2: #{actor_forward.1} parent=0 // loop_pre_header
    _
  $region3: #{actor_forward.1} parent=0 // loop_header
    %s13 = sphi 0, %s17
    %p14 = scmp.ge.s32.totalorder %s13, 4
    %s23 = sphi 0, %s25
    %s26 = sphi 0, %s23
    %s27 = sphi 0, %s26
    %s43 = sphi 0, %s27
    %s47 = sphi 0, %s47
    %s49 = sphi 0, %s47
    %s50 = sphi 0, %s49
    %s64 = sphi 0, %s50
    %s68 = sphi 0, %s68
    %s70 = sphi 0, %s68
    %s71 = sphi 0, %s70
    %s85 = sphi 0, %s71
    %s89 = sphi 0, %s89
    %s91 = sphi 0, %s89
    %s92 = sphi 0, %s91
    %s106 = sphi 0, %s92
    %s110 = sphi 0, %s110
    %s112 = sphi 0, %s110
    %s113 = sphi 0, %s112
    %s127 = sphi 0, %s113
    %s131 = sphi 0, %s131
    %s133 = sphi 0, %s131
    %s134 = sphi 0, %s133
    %s148 = sphi 0, %s134
    %s152 = sphi 0, %s152
    %s154 = sphi 0, %s152
    %s155 = sphi 0, %s154
    %s169 = sphi 0, %s155
    %s175 = sphi 0, %s177
    %s178 = sphi 0, %s175
    %s179 = sphi 0, %s178
    %s195 = sphi 0, %s179
  $region4: #{actor_forward.1} parent=0 // loop_header_branch
    %16 = sbr.rel (%p14) target = $region8
  $region5: #{actor_forward.1} parent=0 // loop_body
    %s18 = ssub.s32 %s13, 1
    %s19 = ssub.s32 %s13, 2
    %s20 = sadd.s32 %s13, 1
    %s21 = ssub.s32 %s13, %s20
    %p22 = scmp.eq.s32.totalorder %s21, 0
    %s24 = sadd.s32 %s23, 1
    %s25 = scalar_select %p22, %s23, %s24
    %p28 = pneg %p22
    %p29 = scmp.eq.s32.totalorder %s13, 1
    %p30 = por %p28, %p29
    %p31 = scmp.ne.s32.totalorder %s23, %s26
    %p32 = scmp.eq.s32.totalorder %s13, 0
    %p33 = por %p31, %p32
    %p34 = scmp.ne.s32.totalorder %s23, %s26
    %p35 = scmp.eq.s32.totalorder %s18, 1
    %p36 = por %p34, %p35
    %p37 = scmp.ne.s32.totalorder %s26, %s27
    %p38 = scmp.eq.s32.totalorder %s18, 0
    %p39 = por %p37, %p38
    %p40 = scmp.ne.s32.totalorder %s26, %s27
    %p41 = scmp.eq.s32.totalorder %s19, 1
    %p42 = por %p40, %p41
    %p44 = scmp.ne.s32.totalorder %s27, %s43
    %p45 = scmp.eq.s32.totalorder %s19, 0
    %p46 = por %p44, %p45
    %s48 = sadd.s32 %s47, 1
    %p51 = scmp.eq.s32.totalorder %s13, 1
    %p52 = scmp.ne.s32.totalorder %s47, %s49
    %p53 = scmp.eq.s32.totalorder %s13, 0
    %p54 = por %p52, %p53
    %p55 = scmp.ne.s32.totalorder %s47, %s49
    %p56 = scmp.eq.s32.totalorder %s18, 1
    %p57 = por %p55, %p56
    %p58 = scmp.ne.s32.totalorder %s49, %s50
    %p59 = scmp.eq.s32.totalorder %s18, 0
    %p60 = por %p58, %p59
    %p61 = scmp.ne.s32.totalorder %s49, %s50
    %p62 = scmp.eq.s32.totalorder %s19, 1
    %p63 = por %p61, %p62
    %p65 = scmp.ne.s32.totalorder %s50, %s64
    %p66 = scmp.eq.s32.totalorder %s19, 0
    %p67 = por %p65, %p66
    %s69 = sadd.s32 %s68, 1
    %p72 = scmp.eq.s32.totalorder %s13, 1
    %p73 = scmp.ne.s32.totalorder %s68, %s70
    %p74 = scmp.eq.s32.totalorder %s13, 0
    %p75 = por %p73, %p74
    %p76 = scmp.ne.s32.totalorder %s68, %s70
    %p77 = scmp.eq.s32.totalorder %s18, 1
    %p78 = por %p76, %p77
    %p79 = scmp.ne.s32.totalorder %s70, %s71
    %p80 = scmp.eq.s32.totalorder %s18, 0
    %p81 = por %p79, %p80
    %p82 = scmp.ne.s32.totalorder %s70, %s71
    %p83 = scmp.eq.s32.totalorder %s19, 1
    %p84 = por %p82, %p83
    %p86 = scmp.ne.s32.totalorder %s71, %s85
    %p87 = scmp.eq.s32.totalorder %s19, 0
    %p88 = por %p86, %p87
    %s90 = sadd.s32 %s89, 1
    %p93 = scmp.eq.s32.totalorder %s13, 1
    %p94 = scmp.ne.s32.totalorder %s89, %s91
    %p95 = scmp.eq.s32.totalorder %s13, 0
    %p96 = por %p94, %p95
    %p97 = scmp.ne.s32.totalorder %s89, %s91
    %p98 = scmp.eq.s32.totalorder %s18, 1
    %p99 = por %p97, %p98
    %p100 = scmp.ne.s32.totalorder %s91, %s92
    %p101 = scmp.eq.s32.totalorder %s18, 0
    %p102 = por %p100, %p101
    %p103 = scmp.ne.s32.totalorder %s91, %s92
    %p104 = scmp.eq.s32.totalorder %s19, 1
    %p105 = por %p103, %p104
    %p107 = scmp.ne.s32.totalorder %s92, %s106
    %p108 = scmp.eq.s32.totalorder %s19, 0
    %p109 = por %p107, %p108
    %s111 = sadd.s32 %s110, 1
    %p114 = scmp.eq.s32.totalorder %s13, 1
    %p115 = scmp.ne.s32.totalorder %s110, %s112
    %p116 = scmp.eq.s32.totalorder %s13, 0
    %p117 = por %p115, %p116
    %p118 = scmp.ne.s32.totalorder %s110, %s112
    %p119 = scmp.eq.s32.totalorder %s18, 1
    %p120 = por %p118, %p119
    %p121 = scmp.ne.s32.totalorder %s112, %s113
    %p122 = scmp.eq.s32.totalorder %s18, 0
    %p123 = por %p121, %p122
    %p124 = scmp.ne.s32.totalorder %s112, %s113
    %p125 = scmp.eq.s32.totalorder %s19, 1
    %p126 = por %p124, %p125
    %p128 = scmp.ne.s32.totalorder %s113, %s127
    %p129 = scmp.eq.s32.totalorder %s19, 0
    %p130 = por %p128, %p129
    %s132 = sadd.s32 %s131, 1
    %p135 = scmp.eq.s32.totalorder %s13, 1
    %p136 = scmp.ne.s32.totalorder %s131, %s133
    %p137 = scmp.eq.s32.totalorder %s13, 0
    %p138 = por %p136, %p137
    %p139 = scmp.ne.s32.totalorder %s131, %s133
    %p140 = scmp.eq.s32.totalorder %s18, 1
    %p141 = por %p139, %p140
    %p142 = scmp.ne.s32.totalorder %s133, %s134
    %p143 = scmp.eq.s32.totalorder %s18, 0
    %p144 = por %p142, %p143
    %p145 = scmp.ne.s32.totalorder %s133, %s134
    %p146 = scmp.eq.s32.totalorder %s19, 1
    %p147 = por %p145, %p146
    %p149 = scmp.ne.s32.totalorder %s134, %s148
    %p150 = scmp.eq.s32.totalorder %s19, 0
    %p151 = por %p149, %p150
    %s153 = sadd.s32 %s152, 1
    %p156 = scmp.eq.s32.totalorder %s13, 1
    %p157 = scmp.ne.s32.totalorder %s152, %s154
    %p158 = scmp.eq.s32.totalorder %s13, 0
    %p159 = por %p157, %p158
    %p160 = scmp.ne.s32.totalorder %s152, %s154
    %p161 = scmp.eq.s32.totalorder %s18, 1
    %p162 = por %p160, %p161
    %p163 = scmp.ne.s32.totalorder %s154, %s155
    %p164 = scmp.eq.s32.totalorder %s18, 0
    %p165 = por %p163, %p164
    %p166 = scmp.ne.s32.totalorder %s154, %s155
    %p167 = scmp.eq.s32.totalorder %s19, 1
    %p168 = por %p166, %p167
    %p170 = scmp.ne.s32.totalorder %s155, %s169
    %p171 = scmp.eq.s32.totalorder %s19, 0
    %p172 = por %p170, %p171
    %s173 = ssub.s32 %s13, %s20
    %p174 = scmp.eq.s32.totalorder %s173, 0
    %s176 = sadd.s32 %s175, 1
    %s177 = scalar_select %p174, %s175, %s176
    %p180 = pneg %p174
    %p181 = scmp.eq.s32.totalorder %s13, 1
    %p182 = por %p180, %p181
    %p183 = scmp.ne.s32.totalorder %s175, %s178
    %p184 = scmp.eq.s32.totalorder %s13, 0
    %p185 = por %p183, %p184
    %p186 = scmp.ne.s32.totalorder %s175, %s178
    %p187 = scmp.eq.s32.totalorder %s18, 1
    %p188 = por %p186, %p187
    %p189 = scmp.ne.s32.totalorder %s178, %s179
    %p190 = scmp.eq.s32.totalorder %s18, 0
    %p191 = por %p189, %p190
    %p192 = scmp.ne.s32.totalorder %s178, %s179
    %p193 = scmp.eq.s32.totalorder %s19, 1
    %p194 = por %p192, %p193
    %p196 = scmp.ne.s32.totalorder %s179, %s195
    %p197 = scmp.eq.s32.totalorder %s19, 0
    %p198 = por %p196, %p197
    %p199 = scmp.le.s32.totalorder 1, %s13
    %p200 = scmp.lt.s32.totalorder %s13, 3
    %p201 = pnand %p199, %p200
    %p202 = pneg %p201
    // Predicated region
    $region9: #{actor_forward.1} parent=5 // pred_check
      _
    $region10: #{actor_forward.1} parent=5 // pred_check_branch
      %204 = sbr.rel (%p201) target = $region12
    $region11: #{actor_forward.1} parent=5 // pred_region
      %s205 = ssub.s32 %s13, 1
      // Predicated region
      $region13: #{actor_forward.1} parent=11 // pred_check
        %p206 = pneg %p60
      $region14: #{actor_forward.1} parent=11 // pred_check_branch
        %208 = sbr.rel (%p206) target = $region16
      $region15: #{actor_forward.1} parent=11 // pred_region
        _
      $region16: #{actor_forward.1} parent=11 // pred_fallthru
        _
      // Predicated region
      $region17: #{actor_forward.1} parent=11 // pred_check
        %p209 = pneg %p81
      $region18: #{actor_forward.1} parent=11 // pred_check_branch
        %211 = sbr.rel (%p209) target = $region20
      $region19: #{actor_forward.1} parent=11 // pred_region
        _
      $region20: #{actor_forward.1} parent=11 // pred_fallthru
        _
      // Predicated region
      $region21: #{actor_forward.1} parent=11 // pred_check
        %p212 = pneg %p102
      $region22: #{actor_forward.1} parent=11 // pred_check_branch
        %214 = sbr.rel (%p212) target = $region24
      $region23: #{actor_forward.1} parent=11 // pred_region
        _
      $region24: #{actor_forward.1} parent=11 // pred_fallthru
        _
      // Predicated region
      $region25: #{actor_forward.1} parent=11 // pred_check
        %p215 = pneg %p123
      $region26: #{actor_forward.1} parent=11 // pred_check_branch
        %217 = sbr.rel (%p215) target = $region28
      $region27: #{actor_forward.1} parent=11 // pred_region
        _
      $region28: #{actor_forward.1} parent=11 // pred_fallthru
        _
      // Predicated region
      $region29: #{actor_forward.1} parent=11 // pred_check
        %p218 = pneg %p144
      $region30: #{actor_forward.1} parent=11 // pred_check_branch
        %220 = sbr.rel (%p218) target = $region32
      $region31: #{actor_forward.1} parent=11 // pred_region
        _
      $region32: #{actor_forward.1} parent=11 // pred_fallthru
        _
      // Predicated region
      $region33: #{actor_forward.1} parent=11 // pred_check
        %p221 = pneg %p165
      $region34: #{actor_forward.1} parent=11 // pred_check_branch
        %223 = sbr.rel (%p221) target = $region36
      $region35: #{actor_forward.1} parent=11 // pred_region
        _
      $region36: #{actor_forward.1} parent=11 // pred_fallthru
        _
    $region12: #{actor_forward.1} parent=5 // pred_fallthru
      _
    %p224 = scmp.lt.s32.totalorder %s13, 2
    // Predicated region
    $region37: #{actor_forward.1} parent=5 // pred_check
      %p225 = pneg %p224
    $region38: #{actor_forward.1} parent=5 // pred_check_branch
      %227 = sbr.rel (%p225) target = $region40
    $region39: #{actor_forward.1} parent=5 // pred_region
      // Predicated region
      $region41: #{actor_forward.1} parent=39 // pred_check
        %p228 = pneg %p33
      $region42: #{actor_forward.1} parent=39 // pred_check_branch
        %230 = sbr.rel (%p228) target = $region44
      $region43: #{actor_forward.1} parent=39 // pred_region
        %s231 = smul.u32 13, %s13
        %p232 = scmp.lt.s32.totalorder %s231, 25
        %s233 = scalar_select %p232, %s231, 25
        %s234 = smul.addr %s233, 8
        %s235 = scalar_lea.vmem %s0, %s234
        %s236 = smul.u32 13, %s13
      $region44: #{actor_forward.1} parent=39 // pred_fallthru
        _
    $region40: #{actor_forward.1} parent=5 // pred_fallthru
      _
    %p237 = scmp.le.s32.totalorder 1, %s13
    %p238 = scmp.lt.s32.totalorder %s13, 3
    %p239 = pnand %p237, %p238
    %p240 = pneg %p239
    // Predicated region
    $region45: #{actor_forward.1} parent=5 // pred_check
      _
    $region46: #{actor_forward.1} parent=5 // pred_check_branch
      %242 = sbr.rel (%p239) target = $region48
    $region47: #{actor_forward.1} parent=5 // pred_region
      %s243 = ssub.s32 %s13, 1
      %s244 = smul.u32 13, %s18
      %p245 = scmp.lt.s32.totalorder %s244, 25
      %s246 = scalar_select %p245, %s244, 25
      %s247 = smul.addr %s246, 8
      %s248 = scalar_lea.vmem %s0, %s247
      %p249 = pneg %p39
      %p250 = pneg %p36
      %p251 = pneg %p60
      %p252 = pneg %p57
      %p253 = pneg %p81
      %p254 = pneg %p78
      %p255 = pneg %p102
      %p256 = pneg %p99
      %p257 = pneg %p123
      %p258 = pneg %p120
      %p259 = pneg %p144
      %p260 = pneg %p141
      %p261 = pneg %p165
      %p262 = pneg %p162
      %p263 = pneg %p191
      %p264 = pneg %p188
      %s265 = smul.u32 13, %s18
      %p266 = scmp.lt.s32.totalorder %s265, 25
      %s267 = scalar_select %p266, %s265, 25
      %s268 = smul.addr %s267, 8
      %s269 = scalar_lea.vmem %s7, %s268
      %s270 = smul.u32 13, %s18
      %p271 = scmp.lt.s32.totalorder %s270, 25
      %s272 = scalar_select %p271, %s270, 25
      %s273 = smul.addr %s272, 8
      %s274 = scalar_lea.vmem %s0, %s273
      %s275 = smul.u32 13, %s18
      %s276 = smul.u32 13, %s18
      %p277 = scmp.lt.s32.totalorder %s276, 25
      %s278 = scalar_select %p277, %s276, 25
      %s279 = smul.addr %s278, 8
      %s280 = scalar_lea.vmem %s7, %s279
      %s281 = smul.u32 13, %s18
      %v282 = vld [vmem:[%s274] sm:$0xff]
      %v283 = vld [vmem:[%s274 + $0x8] sm:$0xff]
      %v284 = vld [vmem:[%s274 + $0x10] sm:$0xff]
      %v285 = vld [vmem:[%s274 + $0x18] sm:$0xff]
      %v286 = vld [vmem:[%s274 + $0x20] sm:$0xff]
      %v287 = vld [vmem:[%s274 + $0x28] sm:$0xff]
      %v288 = vld [vmem:[%s274 + $0x30] sm:$0xff]
      %v289 = vld [vmem:[%s274 + $0x38] sm:$0xff]
      %v290 = vld [vmem:[%s274 + $0x40] sm:$0xff]
      %v291 = vld [vmem:[%s274 + $0x48] sm:$0xff]
      %v292 = vld [vmem:[%s274 + $0x50] sm:$0xff]
      %v293 = vld [vmem:[%s274 + $0x58] sm:$0xff]
      %v294 = vld [vmem:[%s274 + $0x60] sm:$0xff]
      %v295 = vld [vmem:[%s1] sm:$0xf]
      %297 = vset.pattern.permute.xlu0 0
      %298 = vperm.xlu0 %297, %v282
      %v299 = vpop.permute.xlu0 %298
      %302 = vset.pattern.permute.xlu0 0
      %303 = vperm.xlu0 %302, %v283
      %v304 = vpop.permute.xlu0 %303
      %307 = vset.pattern.permute.xlu0 0
      %308 = vperm.xlu0 %307, %v284
      %v309 = vpop.permute.xlu0 %308
      %312 = vset.pattern.permute.xlu0 0
      %313 = vperm.xlu0 %312, %v285
      %v314 = vpop.permute.xlu0 %313
      %317 = vset.pattern.permute.xlu0 0
      %318 = vperm.xlu0 %317, %v286
      %v319 = vpop.permute.xlu0 %318
      %322 = vset.pattern.permute.xlu0 0
      %323 = vperm.xlu0 %322, %v287
      %v324 = vpop.permute.xlu0 %323
      %327 = vset.pattern.permute.xlu0 0
      %328 = vperm.xlu0 %327, %v288
      %v329 = vpop.permute.xlu0 %328
      %332 = vset.pattern.permute.xlu0 0
      %333 = vperm.xlu0 %332, %v289
      %v334 = vpop.permute.xlu0 %333
      %337 = vset.pattern.permute.xlu0 0
      %338 = vperm.xlu0 %337, %v290
      %v339 = vpop.permute.xlu0 %338
      %342 = vset.pattern.permute.xlu0 0
      %343 = vperm.xlu0 %342, %v291
      %v344 = vpop.permute.xlu0 %343
      %347 = vset.pattern.permute.xlu0 0
      %348 = vperm.xlu0 %347, %v292
      %v349 = vpop.permute.xlu0 %348
      %352 = vset.pattern.permute.xlu0 0
      %353 = vperm.xlu0 %352, %v293
      %v354 = vpop.permute.xlu0 %353
      %357 = vset.pattern.permute.xlu0 0
      %358 = vperm.xlu0 %357, %v294
      %v359 = vpop.permute.xlu0 %358
      %v361 = vperm.slane %v295, 0
      %v362 = vmul.f32 %v299, %v361
      %v363 = vmul.f32 %v304, %v361
      %v364 = vmul.f32 %v309, %v361
      %v365 = vmul.f32 %v314, %v361
      %v366 = vmul.f32 %v319, %v361
      %v367 = vmul.f32 %v324, %v361
      %v368 = vmul.f32 %v329, %v361
      %v369 = vmul.f32 %v334, %v361
      %v370 = vmul.f32 %v339, %v361
      %v371 = vmul.f32 %v344, %v361
      %v372 = vmul.f32 %v349, %v361
      %v373 = vmul.f32 %v354, %v361
      %v374 = vmul.f32 %v359, %v361
      %375 = vset.pattern.permute.xlu0 1
      %376 = vperm.xlu0 %375, %v282
      %v377 = vpop.permute.xlu0 %376
      %379 = vset.pattern.permute.xlu0 1
      %380 = vperm.xlu0 %379, %v283
      %v381 = vpop.permute.xlu0 %380
      %383 = vset.pattern.permute.xlu0 1
      %384 = vperm.xlu0 %383, %v284
      %v385 = vpop.permute.xlu0 %384
      %387 = vset.pattern.permute.xlu0 1
      %388 = vperm.xlu0 %387, %v285
      %v389 = vpop.permute.xlu0 %388
      %391 = vset.pattern.permute.xlu0 1
      %392 = vperm.xlu0 %391, %v286
      %v393 = vpop.permute.xlu0 %392
      %395 = vset.pattern.permute.xlu0 1
      %396 = vperm.xlu0 %395, %v287
      %v397 = vpop.permute.xlu0 %396
      %399 = vset.pattern.permute.xlu0 1
      %400 = vperm.xlu0 %399, %v288
      %v401 = vpop.permute.xlu0 %400
      %403 = vset.pattern.permute.xlu0 1
      %404 = vperm.xlu0 %403, %v289
      %v405 = vpop.permute.xlu0 %404
      %407 = vset.pattern.permute.xlu0 1
      %408 = vperm.xlu0 %407, %v290
      %v409 = vpop.permute.xlu0 %408
      %411 = vset.pattern.permute.xlu0 1
      %412 = vperm.xlu0 %411, %v291
      %v413 = vpop.permute.xlu0 %412
      %415 = vset.pattern.permute.xlu0 1
      %416 = vperm.xlu0 %415, %v292
      %v417 = vpop.permute.xlu0 %416
      %419 = vset.pattern.permute.xlu0 1
      %420 = vperm.xlu0 %419, %v293
      %v421 = vpop.permute.xlu0 %420
      %423 = vset.pattern.permute.xlu0 1
      %424 = vperm.xlu0 %423, %v294
      %v425 = vpop.permute.xlu0 %424
      %v427 = vperm.slane %v295, 1
      %v428 = vmul.f32 %v377, %v427
      %v429 = vmul.f32 %v381, %v427
      %v430 = vmul.f32 %v385, %v427
      %v431 = vmul.f32 %v389, %v427
      %v432 = vmul.f32 %v393, %v427
      %v433 = vmul.f32 %v397, %v427
      %v434 = vmul.f32 %v401, %v427
      %v435 = vmul.f32 %v405, %v427
      %v436 = vmul.f32 %v409, %v427
      %v437 = vmul.f32 %v413, %v427
      %v438 = vmul.f32 %v417, %v427
      %v439 = vmul.f32 %v421, %v427
      %v440 = vmul.f32 %v425, %v427
      %v441 = vadd.f32 %v362, %v428
      %v442 = vadd.f32 %v363, %v429
      %v443 = vadd.f32 %v364, %v430
      %v444 = vadd.f32 %v365, %v431
      %v445 = vadd.f32 %v366, %v432
      %v446 = vadd.f32 %v367, %v433
      %v447 = vadd.f32 %v368, %v434
      %v448 = vadd.f32 %v369, %v435
      %v449 = vadd.f32 %v370, %v436
      %v450 = vadd.f32 %v371, %v437
      %v451 = vadd.f32 %v372, %v438
      %v452 = vadd.f32 %v373, %v439
      %v453 = vadd.f32 %v374, %v440
      %454 = vset.pattern.permute.xlu0 2
      %455 = vperm.xlu0 %454, %v282
      %v456 = vpop.permute.xlu0 %455
      %458 = vset.pattern.permute.xlu0 2
      %459 = vperm.xlu0 %458, %v283
      %v460 = vpop.permute.xlu0 %459
      %462 = vset.pattern.permute.xlu0 2
      %463 = vperm.xlu0 %462, %v284
      %v464 = vpop.permute.xlu0 %463
      %466 = vset.pattern.permute.xlu0 2
      %467 = vperm.xlu0 %466, %v285
      %v468 = vpop.permute.xlu0 %467
      %470 = vset.pattern.permute.xlu0 2
      %471 = vperm.xlu0 %470, %v286
      %v472 = vpop.permute.xlu0 %471
      %474 = vset.pattern.permute.xlu0 2
      %475 = vperm.xlu0 %474, %v287
      %v476 = vpop.permute.xlu0 %475
      %478 = vset.pattern.permute.xlu0 2
      %479 = vperm.xlu0 %478, %v288
      %v480 = vpop.permute.xlu0 %479
      %482 = vset.pattern.permute.xlu0 2
      %483 = vperm.xlu0 %482, %v289
      %v484 = vpop.permute.xlu0 %483
      %486 = vset.pattern.permute.xlu0 2
      %487 = vperm.xlu0 %486, %v290
      %v488 = vpop.permute.xlu0 %487
      %490 = vset.pattern.permute.xlu0 2
      %491 = vperm.xlu0 %490, %v291
      %v492 = vpop.permute.xlu0 %491
      %494 = vset.pattern.permute.xlu0 2
      %495 = vperm.xlu0 %494, %v292
      %v496 = vpop.permute.xlu0 %495
      %498 = vset.pattern.permute.xlu0 2
      %499 = vperm.xlu0 %498, %v293
      %v500 = vpop.permute.xlu0 %499
      %502 = vset.pattern.permute.xlu0 2
      %503 = vperm.xlu0 %502, %v294
      %v504 = vpop.permute.xlu0 %503
      %v506 = vperm.slane %v295, 2
      %v507 = vmul.f32 %v456, %v506
      %v508 = vmul.f32 %v460, %v506
      %v509 = vmul.f32 %v464, %v506
      %v510 = vmul.f32 %v468, %v506
      %v511 = vmul.f32 %v472, %v506
      %v512 = vmul.f32 %v476, %v506
      %v513 = vmul.f32 %v480, %v506
      %v514 = vmul.f32 %v484, %v506
      %v515 = vmul.f32 %v488, %v506
      %v516 = vmul.f32 %v492, %v506
      %v517 = vmul.f32 %v496, %v506
      %v518 = vmul.f32 %v500, %v506
      %v519 = vmul.f32 %v504, %v506
      %v520 = vadd.f32 %v441, %v507
      %v521 = vadd.f32 %v442, %v508
      %v522 = vadd.f32 %v443, %v509
      %v523 = vadd.f32 %v444, %v510
      %v524 = vadd.f32 %v445, %v511
      %v525 = vadd.f32 %v446, %v512
      %v526 = vadd.f32 %v447, %v513
      %v527 = vadd.f32 %v448, %v514
      %v528 = vadd.f32 %v449, %v515
      %v529 = vadd.f32 %v450, %v516
      %v530 = vadd.f32 %v451, %v517
      %v531 = vadd.f32 %v452, %v518
      %v532 = vadd.f32 %v453, %v519
      %533 = vset.pattern.permute.xlu0 3
      %534 = vperm.xlu0 %533, %v282
      %v535 = vpop.permute.xlu0 %534
      %537 = vset.pattern.permute.xlu0 3
      %538 = vperm.xlu0 %537, %v283
      %v539 = vpop.permute.xlu0 %538
      %541 = vset.pattern.permute.xlu0 3
      %542 = vperm.xlu0 %541, %v284
      %v543 = vpop.permute.xlu0 %542
      %545 = vset.pattern.permute.xlu0 3
      %546 = vperm.xlu0 %545, %v285
      %v547 = vpop.permute.xlu0 %546
      %549 = vset.pattern.permute.xlu0 3
      %550 = vperm.xlu0 %549, %v286
      %v551 = vpop.permute.xlu0 %550
      %553 = vset.pattern.permute.xlu0 3
      %554 = vperm.xlu0 %553, %v287
      %v555 = vpop.permute.xlu0 %554
      %557 = vset.pattern.permute.xlu0 3
      %558 = vperm.xlu0 %557, %v288
      %v559 = vpop.permute.xlu0 %558
      %561 = vset.pattern.permute.xlu0 3
      %562 = vperm.xlu0 %561, %v289
      %v563 = vpop.permute.xlu0 %562
      %565 = vset.pattern.permute.xlu0 3
      %566 = vperm.xlu0 %565, %v290
      %v567 = vpop.permute.xlu0 %566
      %569 = vset.pattern.permute.xlu0 3
      %570 = vperm.xlu0 %569, %v291
      %v571 = vpop.permute.xlu0 %570
      %573 = vset.pattern.permute.xlu0 3
      %574 = vperm.xlu0 %573, %v292
      %v575 = vpop.permute.xlu0 %574
      %577 = vset.pattern.permute.xlu0 3
      %578 = vperm.xlu0 %577, %v293
      %v579 = vpop.permute.xlu0 %578
      %581 = vset.pattern.permute.xlu0 3
      %582 = vperm.xlu0 %581, %v294
      %v583 = vpop.permute.xlu0 %582
      %v585 = vperm.slane %v295, 3
      %v586 = vmul.f32 %v535, %v585
      %v587 = vmul.f32 %v539, %v585
      %v588 = vmul.f32 %v543, %v585
      %v589 = vmul.f32 %v547, %v585
      %v590 = vmul.f32 %v551, %v585
      %v591 = vmul.f32 %v555, %v585
      %v592 = vmul.f32 %v559, %v585
      %v593 = vmul.f32 %v563, %v585
      %v594 = vmul.f32 %v567, %v585
      %v595 = vmul.f32 %v571, %v585
      %v596 = vmul.f32 %v575, %v585
      %v597 = vmul.f32 %v579, %v585
      %v598 = vmul.f32 %v583, %v585
      %v599 = vadd.f32 %v520, %v586
      %v600 = vadd.f32 %v521, %v587
      %v601 = vadd.f32 %v522, %v588
      %v602 = vadd.f32 %v523, %v589
      %v603 = vadd.f32 %v524, %v590
      %v604 = vadd.f32 %v525, %v591
      %v605 = vadd.f32 %v526, %v592
      %v606 = vadd.f32 %v527, %v593
      %v607 = vadd.f32 %v528, %v594
      %v608 = vadd.f32 %v529, %v595
      %v609 = vadd.f32 %v530, %v596
      %v610 = vadd.f32 %v531, %v597
      %v611 = vadd.f32 %v532, %v598
      %v612 = vld [vmem:[%s2] sm:$0x1]
      %v614 = vperm.slane %v612, 0
      %v616 = vadd.f32 %v599, %v614
      %v617 = vadd.f32 %v600, %v614
      %v618 = vadd.f32 %v601, %v614
      %v619 = vadd.f32 %v602, %v614
      %v620 = vadd.f32 %v603, %v614
      %v621 = vadd.f32 %v604, %v614
      %v622 = vadd.f32 %v605, %v614
      %v623 = vadd.f32 %v606, %v614
      %v624 = vadd.f32 %v607, %v614
      %v625 = vadd.f32 %v608, %v614
      %v626 = vadd.f32 %v609, %v614
      %v627 = vadd.f32 %v610, %v614
      %v628 = vadd.f32 %v611, %v614
      %v629 = vmax.f32 %v616, 0.0
      %v630 = vmax.f32 %v617, 0.0
      %v631 = vmax.f32 %v618, 0.0
      %v632 = vmax.f32 %v619, 0.0
      %v633 = vmax.f32 %v620, 0.0
      %v634 = vmax.f32 %v621, 0.0
      %v635 = vmax.f32 %v622, 0.0
      %v636 = vmax.f32 %v623, 0.0
      %v637 = vmax.f32 %v624, 0.0
      %v638 = vmax.f32 %v625, 0.0
      %v639 = vmax.f32 %v626, 0.0
      %v640 = vmax.f32 %v627, 0.0
      %v641 = vmax.f32 %v628, 0.0
      %v642 = vpack.c.bf16 %v630, %v629
      %v643 = vpack.c.bf16 %v632, %v631
      %v644 = vpack.c.bf16 %v634, %v633
      %v645 = vpack.c.bf16 %v636, %v635
      %v646 = vpack.c.bf16 %v638, %v637
      %v647 = vpack.c.bf16 %v640, %v639
      %v648 = vpack.c.bf16 %v641, %v641
      %v649 = vld [vmem:[%s3] sm:$0xf]
      %v650 = vld [vmem:[%s3 + $0x4] sm:$0xf]
      %v651 = vld [vmem:[%s3 + $0x8] sm:$0xf]
      %v652 = vld [vmem:[%s3 + $0xc] sm:$0xf]
      %v653 = vld [vmem:[%s3 + $0x10] sm:$0xf]
      %v654 = vld [vmem:[%s3 + $0x14] sm:$0xf]
      %v655 = vld [vmem:[%s3 + $0x18] sm:$0xf]
      %v656 = vld [vmem:[%s3 + $0x1c] sm:$0xf]
      %v657 = vld [vmem:[%s3 + $0x20] sm:$0xf]
      %v658 = vld [vmem:[%s3 + $0x24] sm:$0xf]
      %v659 = vld [vmem:[%s3 + $0x28] sm:$0xf]
      %v660 = vld [vmem:[%s3 + $0x2c] sm:$0xf]
      %v661 = vld [vmem:[%s3 + $0x30] sm:$0xf]
      %v662 = vld [vmem:[%s3 + $0x34] sm:$0xf]
      %v663 = vld [vmem:[%s3 + $0x38] sm:$0xf]
      %v664 = vld [vmem:[%s3 + $0x3c] sm:$0xf]
      %v665 = vld [vmem:[%s4] sm:$0x1]
      %v667 = vperm.slane %v665, 0
      %v685 = vunpack.c.l.b16 %v649
      %v686 = vunpack.c.l.b16 %v650
      %v687 = vunpack.c.l.b16 %v651
      %v688 = vunpack.c.l.b16 %v652
      %v689 = vunpack.c.l.b16 %v653
      %v690 = vunpack.c.l.b16 %v654
      %v691 = vunpack.c.l.b16 %v655
      %v692 = vunpack.c.l.b16 %v656
      %v693 = vunpack.c.l.b16 %v657
      %v694 = vunpack.c.l.b16 %v658
      %v695 = vunpack.c.l.b16 %v659
      %v696 = vunpack.c.l.b16 %v660
      %v697 = vunpack.c.l.b16 %v661
      %v698 = vunpack.c.l.b16 %v662
      %v699 = vunpack.c.l.b16 %v663
      %v700 = vunpack.c.l.b16 %v664
      %v701 = vpack.c.b16 %v686, %v685
      %v702 = vpack.c.b16 %v688, %v687
      %v703 = vpack.c.b16 %v690, %v689
      %v704 = vpack.c.b16 %v692, %v691
      %v705 = vpack.c.b16 %v694, %v693
      %v706 = vpack.c.b16 %v696, %v695
      %v707 = vpack.c.b16 %v698, %v697
      %v708 = vpack.c.b16 %v700, %v699
      %717 = vmatpush.bf16.msra.mxu0 %v708
      %718 = vmatpush.bf16.msra.mxu0 %v707
      %719 = vmatpush.bf16.msra.mxu0 %v706
      %720 = vmatpush.bf16.msra.mxu0 %v705
      %721 = vmatpush.bf16.msra.mxu0 %v704
      %722 = vmatpush.bf16.msra.mxu0 %v703
      %723 = vmatpush.bf16.msra.mxu0 %v702
      %724 = vmatpush.bf16.msra.mxu0 %v701
      %725 = vmatmul.bf16.gmra.mxu0 %v642
      %v726 = vpop.f32.mrf.mxu0
      %v727 = vadd.f32 %v667, %v726
      %v728 = vpop.f32.mrf.mxu0
      %v729 = vadd.f32 %v667, %v728
      %730 = vmatmul.bf16.gmra.mxu0 %v643
      %v731 = vpop.f32.mrf.mxu0
      %v732 = vadd.f32 %v667, %v731
      %v733 = vpop.f32.mrf.mxu0
      %v734 = vadd.f32 %v667, %v733
      %735 = vmatmul.bf16.gmra.mxu0 %v644
      %v736 = vpop.f32.mrf.mxu0
      %v737 = vadd.f32 %v667, %v736
      %v738 = vpop.f32.mrf.mxu0
      %v739 = vadd.f32 %v667, %v738
      %740 = vmatmul.bf16.gmra.mxu0 %v645
      %v741 = vpop.f32.mrf.mxu0
      %v742 = vadd.f32 %v667, %v741
      %v743 = vpop.f32.mrf.mxu0
      %v744 = vadd.f32 %v667, %v743
      %745 = vmatmul.bf16.gmra.mxu0 %v646
      %v746 = vpop.f32.mrf.mxu0
      %v747 = vadd.f32 %v667, %v746
      %v748 = vpop.f32.mrf.mxu0
      %v749 = vadd.f32 %v667, %v748
      %750 = vmatmul.bf16.gmra.mxu0 %v647
      %v751 = vpop.f32.mrf.mxu0
      %v752 = vadd.f32 %v667, %v751
      %v753 = vpop.f32.mrf.mxu0
      %v754 = vadd.f32 %v667, %v753
      %755 = vmatmul.bf16.gmra.mxu0 %v648
      %v756 = vpop.f32.mrf.mxu0
      %v757 = vadd.f32 %v667, %v756
      %v758 = vpop.f32.mrf.mxu0
      %759 = vdwg.mxu0
      %v760 = vmax.f32 %v727, 0.0
      %v761 = vmax.f32 %v729, 0.0
      %v762 = vmax.f32 %v732, 0.0
      %v763 = vmax.f32 %v734, 0.0
      %v764 = vmax.f32 %v737, 0.0
      %v765 = vmax.f32 %v739, 0.0
      %v766 = vmax.f32 %v742, 0.0
      %v767 = vmax.f32 %v744, 0.0
      %v768 = vmax.f32 %v747, 0.0
      %v769 = vmax.f32 %v749, 0.0
      %v770 = vmax.f32 %v752, 0.0
      %v771 = vmax.f32 %v754, 0.0
      %v772 = vmax.f32 %v757, 0.0
      %v773 = vpack.c.bf16 %v761, %v760
      %v774 = vpack.c.bf16 %v763, %v762
      %v775 = vpack.c.bf16 %v765, %v764
      %v776 = vpack.c.bf16 %v767, %v766
      %v777 = vpack.c.bf16 %v769, %v768
      %v778 = vpack.c.bf16 %v771, %v770
      %v779 = vpack.c.bf16 %v772, %v772
      %v780 = vld [vmem:[%s5] sm:$0xf]
      %v781 = vld [vmem:[%s5 + $0x4] sm:$0xf]
      %v782 = vld [vmem:[%s5 + $0x8] sm:$0xf]
      %v783 = vld [vmem:[%s5 + $0xc] sm:$0xf]
      %v784 = vld [vmem:[%s5 + $0x10] sm:$0xf]
      %v785 = vld [vmem:[%s5 + $0x14] sm:$0xf]
      %v786 = vld [vmem:[%s5 + $0x18] sm:$0xf]
      %v787 = vld [vmem:[%s5 + $0x1c] sm:$0xf]
      %v788 = vld [vmem:[%s5 + $0x20] sm:$0xf]
      %v789 = vld [vmem:[%s5 + $0x24] sm:$0xf]
      %v790 = vld [vmem:[%s5 + $0x28] sm:$0xf]
      %v791 = vld [vmem:[%s5 + $0x2c] sm:$0xf]
      %v792 = vld [vmem:[%s5 + $0x30] sm:$0xf]
      %v793 = vld [vmem:[%s5 + $0x34] sm:$0xf]
      %v794 = vld [vmem:[%s5 + $0x38] sm:$0xf]
      %v795 = vld [vmem:[%s5 + $0x3c] sm:$0xf]
      %v796 = vld [vmem:[%s6] sm:$0x1]
      %v798 = vperm.slane %v796, 0
      %v816 = vunpack.c.l.b16 %v780
      %v817 = vunpack.c.l.b16 %v781
      %v818 = vunpack.c.l.b16 %v782
      %v819 = vunpack.c.l.b16 %v783
      %v820 = vunpack.c.l.b16 %v784
      %v821 = vunpack.c.l.b16 %v785
      %v822 = vunpack.c.l.b16 %v786
      %v823 = vunpack.c.l.b16 %v787
      %v824 = vunpack.c.l.b16 %v788
      %v825 = vunpack.c.l.b16 %v789
      %v826 = vunpack.c.l.b16 %v790
      %v827 = vunpack.c.l.b16 %v791
      %v828 = vunpack.c.l.b16 %v792
      %v829 = vunpack.c.l.b16 %v793
      %v830 = vunpack.c.l.b16 %v794
      %v831 = vunpack.c.l.b16 %v795
      %v832 = vpack.c.b16 %v817, %v816
      %v833 = vpack.c.b16 %v819, %v818
      %v834 = vpack.c.b16 %v821, %v820
      %v835 = vpack.c.b16 %v823, %v822
      %v836 = vpack.c.b16 %v825, %v824
      %v837 = vpack.c.b16 %v827, %v826
      %v838 = vpack.c.b16 %v829, %v828
      %v839 = vpack.c.b16 %v831, %v830
      %848 = vmatpush.bf16.msra.mxu0 %v839
      %849 = vmatpush.bf16.msra.mxu0 %v838
      %850 = vmatpush.bf16.msra.mxu0 %v837
      %851 = vmatpush.bf16.msra.mxu0 %v836
      %852 = vmatpush.bf16.msra.mxu0 %v835
      %853 = vmatpush.bf16.msra.mxu0 %v834
      %854 = vmatpush.bf16.msra.mxu0 %v833
      %855 = vmatpush.bf16.msra.mxu0 %v832
      %856 = vmatmul.bf16.gmra.mxu0 %v773
      %v857 = vpop.f32.mrf.mxu0
      %v858 = vadd.f32 %v798, %v857
      %v859 = vpop.f32.mrf.mxu0
      %v860 = vadd.f32 %v798, %v859
      %861 = vmatmul.bf16.gmra.mxu0 %v774
      %v862 = vpop.f32.mrf.mxu0
      %v863 = vadd.f32 %v798, %v862
      %v864 = vpop.f32.mrf.mxu0
      %v865 = vadd.f32 %v798, %v864
      %866 = vmatmul.bf16.gmra.mxu0 %v775
      %v867 = vpop.f32.mrf.mxu0
      %v868 = vadd.f32 %v798, %v867
      %v869 = vpop.f32.mrf.mxu0
      %v870 = vadd.f32 %v798, %v869
      %871 = vmatmul.bf16.gmra.mxu0 %v776
      %v872 = vpop.f32.mrf.mxu0
      %v873 = vadd.f32 %v798, %v872
      %v874 = vpop.f32.mrf.mxu0
      %v875 = vadd.f32 %v798, %v874
      %876 = vmatmul.bf16.gmra.mxu0 %v777
      %v877 = vpop.f32.mrf.mxu0
      %v878 = vadd.f32 %v798, %v877
      %v879 = vpop.f32.mrf.mxu0
      %v880 = vadd.f32 %v798, %v879
      %881 = vmatmul.bf16.gmra.mxu0 %v778
      %v882 = vpop.f32.mrf.mxu0
      %v883 = vadd.f32 %v798, %v882
      %v884 = vpop.f32.mrf.mxu0
      %v885 = vadd.f32 %v798, %v884
      %886 = vmatmul.bf16.gmra.mxu0 %v779
      %v887 = vpop.f32.mrf.mxu0
      %v888 = vadd.f32 %v798, %v887
      %v889 = vpop.f32.mrf.mxu0
      %890 = vdwg.mxu0
      %891 = vmax.xlane.f32.xlu0 %v858
      %v892 = vpop.xlane.xlu0 %891
      %893 = vmax.xlane.f32.xlu0 %v860
      %v894 = vpop.xlane.xlu0 %893
      %895 = vmax.xlane.f32.xlu0 %v863
      %v896 = vpop.xlane.xlu0 %895
      %897 = vmax.xlane.f32.xlu0 %v865
      %v898 = vpop.xlane.xlu0 %897
      %899 = vmax.xlane.f32.xlu0 %v868
      %v900 = vpop.xlane.xlu0 %899
      %901 = vmax.xlane.f32.xlu0 %v870
      %v902 = vpop.xlane.xlu0 %901
      %903 = vmax.xlane.f32.xlu0 %v873
      %v904 = vpop.xlane.xlu0 %903
      %905 = vmax.xlane.f32.xlu0 %v875
      %v906 = vpop.xlane.xlu0 %905
      %907 = vmax.xlane.f32.xlu0 %v878
      %v908 = vpop.xlane.xlu0 %907
      %909 = vmax.xlane.f32.xlu0 %v880
      %v910 = vpop.xlane.xlu0 %909
      %911 = vmax.xlane.f32.xlu0 %v883
      %v912 = vpop.xlane.xlu0 %911
      %913 = vmax.xlane.f32.xlu0 %v885
      %v914 = vpop.xlane.xlu0 %913
      %915 = vmax.xlane.f32.xlu0 %v888
      %v916 = vpop.xlane.xlu0 %915
      %v917 = vsub.f32 %v858, %v892
      %v918 = vsub.f32 %v860, %v894
      %v919 = vsub.f32 %v863, %v896
      %v920 = vsub.f32 %v865, %v898
      %v921 = vsub.f32 %v868, %v900
      %v922 = vsub.f32 %v870, %v902
      %v923 = vsub.f32 %v873, %v904
      %v924 = vsub.f32 %v875, %v906
      %v925 = vsub.f32 %v878, %v908
      %v926 = vsub.f32 %v880, %v910
      %v927 = vsub.f32 %v883, %v912
      %v928 = vsub.f32 %v885, %v914
      %v929 = vsub.f32 %v888, %v916
      %v930 = vmul.f32 %v917, 1.442695
      %v931 = vpow.pop %v930
      %v932 = vmul.f32 %v918, 1.442695
      %v933 = vpow.pop %v932
      %v934 = vmul.f32 %v919, 1.442695
      %v935 = vpow.pop %v934
      %v936 = vmul.f32 %v920, 1.442695
      %v937 = vpow.pop %v936
      %v938 = vmul.f32 %v921, 1.442695
      %v939 = vpow.pop %v938
      %v940 = vmul.f32 %v922, 1.442695
      %v941 = vpow.pop %v940
      %v942 = vmul.f32 %v923, 1.442695
      %v943 = vpow.pop %v942
      %v944 = vmul.f32 %v924, 1.442695
      %v945 = vpow.pop %v944
      %v946 = vmul.f32 %v925, 1.442695
      %v947 = vpow.pop %v946
      %v948 = vmul.f32 %v926, 1.442695
      %v949 = vpow.pop %v948
      %v950 = vmul.f32 %v927, 1.442695
      %v951 = vpow.pop %v950
      %v952 = vmul.f32 %v928, 1.442695
      %v953 = vpow.pop %v952
      %v954 = vmul.f32 %v929, 1.442695
      %v955 = vpow.pop %v954
      %956 = vadd.xlane.f32.xlu0 %v931
      %v957 = vpop.xlane.xlu0 %956
      %958 = vadd.xlane.f32.xlu0 %v933
      %v959 = vpop.xlane.xlu0 %958
      %960 = vadd.xlane.f32.xlu0 %v935
      %v961 = vpop.xlane.xlu0 %960
      %962 = vadd.xlane.f32.xlu0 %v937
      %v963 = vpop.xlane.xlu0 %962
      %964 = vadd.xlane.f32.xlu0 %v939
      %v965 = vpop.xlane.xlu0 %964
      %966 = vadd.xlane.f32.xlu0 %v941
      %v967 = vpop.xlane.xlu0 %966
      %968 = vadd.xlane.f32.xlu0 %v943
      %v969 = vpop.xlane.xlu0 %968
      %970 = vadd.xlane.f32.xlu0 %v945
      %v971 = vpop.xlane.xlu0 %970
      %972 = vadd.xlane.f32.xlu0 %v947
      %v973 = vpop.xlane.xlu0 %972
      %974 = vadd.xlane.f32.xlu0 %v949
      %v975 = vpop.xlane.xlu0 %974
      %976 = vadd.xlane.f32.xlu0 %v951
      %v977 = vpop.xlane.xlu0 %976
      %978 = vadd.xlane.f32.xlu0 %v953
      %v979 = vpop.xlane.xlu0 %978
      %980 = vadd.xlane.f32.xlu0 %v955
      %v981 = vpop.xlane.xlu0 %980
      %v982 = vrcp.pop %v957
      %v983 = vmul.f32 %v957, %v982
      %v984 = vsub.f32 1.0, %v983
      %v985 = vmul.f32 %v982, %v984
      %v986 = vadd.f32 %v982, %v985
      %vm987 = vweird.f32 %v957
      %vm988 = vweird.f32 %v982
      %vm989 = vmor %vm987, %vm988
      %v990 = vsel %vm989, %v982, %v986
      %v991 = vand.u32 2147483647, %v957
      %vm992 = vcmp.eq.f32.partialorder %v991, 8.507059e+37
      %v993 = vand.u32 %v957, 2147483648
      %v994 = vor.u32 1.1754944e-38, %v993
      %v995 = vsel %vm992, %v994, %v990
      %v996 = vmul.f32 %v931, %v995
      %v997 = vrcp.pop %v959
      %v998 = vmul.f32 %v959, %v997
      %v999 = vsub.f32 1.0, %v998
      %v1000 = vmul.f32 %v997, %v999
      %v1001 = vadd.f32 %v997, %v1000
      %vm1002 = vweird.f32 %v959
      %vm1003 = vweird.f32 %v997
      %vm1004 = vmor %vm1002, %vm1003
      %v1005 = vsel %vm1004, %v997, %v1001
      %v1006 = vand.u32 2147483647, %v959
      %vm1007 = vcmp.eq.f32.partialorder %v1006, 8.507059e+37
      %v1008 = vand.u32 %v959, 2147483648
      %v1009 = vor.u32 1.1754944e-38, %v1008
      %v1010 = vsel %vm1007, %v1009, %v1005
      %v1011 = vmul.f32 %v933, %v1010
      %v1012 = vrcp.pop %v961
      %v1013 = vmul.f32 %v961, %v1012
      %v1014 = vsub.f32 1.0, %v1013
      %v1015 = vmul.f32 %v1012, %v1014
      %v1016 = vadd.f32 %v1012, %v1015
      %vm1017 = vweird.f32 %v961
      %vm1018 = vweird.f32 %v1012
      %vm1019 = vmor %vm1017, %vm1018
      %v1020 = vsel %vm1019, %v1012, %v1016
      %v1021 = vand.u32 2147483647, %v961
      %vm1022 = vcmp.eq.f32.partialorder %v1021, 8.507059e+37
      %v1023 = vand.u32 %v961, 2147483648
      %v1024 = vor.u32 1.1754944e-38, %v1023
      %v1025 = vsel %vm1022, %v1024, %v1020
      %v1026 = vmul.f32 %v935, %v1025
      %v1027 = vrcp.pop %v963
      %v1028 = vmul.f32 %v963, %v1027
      %v1029 = vsub.f32 1.0, %v1028
      %v1030 = vmul.f32 %v1027, %v1029
      %v1031 = vadd.f32 %v1027, %v1030
      %vm1032 = vweird.f32 %v963
      %vm1033 = vweird.f32 %v1027
      %vm1034 = vmor %vm1032, %vm1033
      %v1035 = vsel %vm1034, %v1027, %v1031
      %v1036 = vand.u32 2147483647, %v963
      %vm1037 = vcmp.eq.f32.partialorder %v1036, 8.507059e+37
      %v1038 = vand.u32 %v963, 2147483648
      %v1039 = vor.u32 1.1754944e-38, %v1038
      %v1040 = vsel %vm1037, %v1039, %v1035
      %v1041 = vmul.f32 %v937, %v1040
      %v1042 = vrcp.pop %v965
      %v1043 = vmul.f32 %v965, %v1042
      %v1044 = vsub.f32 1.0, %v1043
      %v1045 = vmul.f32 %v1042, %v1044
      %v1046 = vadd.f32 %v1042, %v1045
      %vm1047 = vweird.f32 %v965
      %vm1048 = vweird.f32 %v1042
      %vm1049 = vmor %vm1047, %vm1048
      %v1050 = vsel %vm1049, %v1042, %v1046
      %v1051 = vand.u32 2147483647, %v965
      %vm1052 = vcmp.eq.f32.partialorder %v1051, 8.507059e+37
      %v1053 = vand.u32 %v965, 2147483648
      %v1054 = vor.u32 1.1754944e-38, %v1053
      %v1055 = vsel %vm1052, %v1054, %v1050
      %v1056 = vmul.f32 %v939, %v1055
      %v1057 = vrcp.pop %v967
      %v1058 = vmul.f32 %v967, %v1057
      %v1059 = vsub.f32 1.0, %v1058
      %v1060 = vmul.f32 %v1057, %v1059
      %v1061 = vadd.f32 %v1057, %v1060
      %vm1062 = vweird.f32 %v967
      %vm1063 = vweird.f32 %v1057
      %vm1064 = vmor %vm1062, %vm1063
      %v1065 = vsel %vm1064, %v1057, %v1061
      %v1066 = vand.u32 2147483647, %v967
      %vm1067 = vcmp.eq.f32.partialorder %v1066, 8.507059e+37
      %v1068 = vand.u32 %v967, 2147483648
      %v1069 = vor.u32 1.1754944e-38, %v1068
      %v1070 = vsel %vm1067, %v1069, %v1065
      %v1071 = vmul.f32 %v941, %v1070
      %v1072 = vrcp.pop %v969
      %v1073 = vmul.f32 %v969, %v1072
      %v1074 = vsub.f32 1.0, %v1073
      %v1075 = vmul.f32 %v1072, %v1074
      %v1076 = vadd.f32 %v1072, %v1075
      %vm1077 = vweird.f32 %v969
      %vm1078 = vweird.f32 %v1072
      %vm1079 = vmor %vm1077, %vm1078
      %v1080 = vsel %vm1079, %v1072, %v1076
      %v1081 = vand.u32 2147483647, %v969
      %vm1082 = vcmp.eq.f32.partialorder %v1081, 8.507059e+37
      %v1083 = vand.u32 %v969, 2147483648
      %v1084 = vor.u32 1.1754944e-38, %v1083
      %v1085 = vsel %vm1082, %v1084, %v1080
      %v1086 = vmul.f32 %v943, %v1085
      %v1087 = vrcp.pop %v971
      %v1088 = vmul.f32 %v971, %v1087
      %v1089 = vsub.f32 1.0, %v1088
      %v1090 = vmul.f32 %v1087, %v1089
      %v1091 = vadd.f32 %v1087, %v1090
      %vm1092 = vweird.f32 %v971
      %vm1093 = vweird.f32 %v1087
      %vm1094 = vmor %vm1092, %vm1093
      %v1095 = vsel %vm1094, %v1087, %v1091
      %v1096 = vand.u32 2147483647, %v971
      %vm1097 = vcmp.eq.f32.partialorder %v1096, 8.507059e+37
      %v1098 = vand.u32 %v971, 2147483648
      %v1099 = vor.u32 1.1754944e-38, %v1098
      %v1100 = vsel %vm1097, %v1099, %v1095
      %v1101 = vmul.f32 %v945, %v1100
      %v1102 = vrcp.pop %v973
      %v1103 = vmul.f32 %v973, %v1102
      %v1104 = vsub.f32 1.0, %v1103
      %v1105 = vmul.f32 %v1102, %v1104
      %v1106 = vadd.f32 %v1102, %v1105
      %vm1107 = vweird.f32 %v973
      %vm1108 = vweird.f32 %v1102
      %vm1109 = vmor %vm1107, %vm1108
      %v1110 = vsel %vm1109, %v1102, %v1106
      %v1111 = vand.u32 2147483647, %v973
      %vm1112 = vcmp.eq.f32.partialorder %v1111, 8.507059e+37
      %v1113 = vand.u32 %v973, 2147483648
      %v1114 = vor.u32 1.1754944e-38, %v1113
      %v1115 = vsel %vm1112, %v1114, %v1110
      %v1116 = vmul.f32 %v947, %v1115
      %v1117 = vrcp.pop %v975
      %v1118 = vmul.f32 %v975, %v1117
      %v1119 = vsub.f32 1.0, %v1118
      %v1120 = vmul.f32 %v1117, %v1119
      %v1121 = vadd.f32 %v1117, %v1120
      %vm1122 = vweird.f32 %v975
      %vm1123 = vweird.f32 %v1117
      %vm1124 = vmor %vm1122, %vm1123
      %v1125 = vsel %vm1124, %v1117, %v1121
      %v1126 = vand.u32 2147483647, %v975
      %vm1127 = vcmp.eq.f32.partialorder %v1126, 8.507059e+37
      %v1128 = vand.u32 %v975, 2147483648
      %v1129 = vor.u32 1.1754944e-38, %v1128
      %v1130 = vsel %vm1127, %v1129, %v1125
      %v1131 = vmul.f32 %v949, %v1130
      %v1132 = vrcp.pop %v977
      %v1133 = vmul.f32 %v977, %v1132
      %v1134 = vsub.f32 1.0, %v1133
      %v1135 = vmul.f32 %v1132, %v1134
      %v1136 = vadd.f32 %v1132, %v1135
      %vm1137 = vweird.f32 %v977
      %vm1138 = vweird.f32 %v1132
      %vm1139 = vmor %vm1137, %vm1138
      %v1140 = vsel %vm1139, %v1132, %v1136
      %v1141 = vand.u32 2147483647, %v977
      %vm1142 = vcmp.eq.f32.partialorder %v1141, 8.507059e+37
      %v1143 = vand.u32 %v977, 2147483648
      %v1144 = vor.u32 1.1754944e-38, %v1143
      %v1145 = vsel %vm1142, %v1144, %v1140
      %v1146 = vmul.f32 %v951, %v1145
      %v1147 = vrcp.pop %v979
      %v1148 = vmul.f32 %v979, %v1147
      %v1149 = vsub.f32 1.0, %v1148
      %v1150 = vmul.f32 %v1147, %v1149
      %v1151 = vadd.f32 %v1147, %v1150
      %vm1152 = vweird.f32 %v979
      %vm1153 = vweird.f32 %v1147
      %vm1154 = vmor %vm1152, %vm1153
      %v1155 = vsel %vm1154, %v1147, %v1151
      %v1156 = vand.u32 2147483647, %v979
      %vm1157 = vcmp.eq.f32.partialorder %v1156, 8.507059e+37
      %v1158 = vand.u32 %v979, 2147483648
      %v1159 = vor.u32 1.1754944e-38, %v1158
      %v1160 = vsel %vm1157, %v1159, %v1155
      %v1161 = vmul.f32 %v953, %v1160
      %v1162 = vrcp.pop %v981
      %v1163 = vmul.f32 %v981, %v1162
      %v1164 = vsub.f32 1.0, %v1163
      %v1165 = vmul.f32 %v1162, %v1164
      %v1166 = vadd.f32 %v1162, %v1165
      %vm1167 = vweird.f32 %v981
      %vm1168 = vweird.f32 %v1162
      %vm1169 = vmor %vm1167, %vm1168
      %v1170 = vsel %vm1169, %v1162, %v1166
      %v1171 = vand.u32 2147483647, %v981
      %vm1172 = vcmp.eq.f32.partialorder %v1171, 8.507059e+37
      %v1173 = vand.u32 %v981, 2147483648
      %v1174 = vor.u32 1.1754944e-38, %v1173
      %v1175 = vsel %vm1172, %v1174, %v1170
      %v1176 = vmul.f32 %v955, %v1175
      %1177 = vst [vmem:[%s280] sm:$0xff] %v996
      %1178 = vst [vmem:[%s280 + $0x8] sm:$0xff] %v1011
      %1179 = vst [vmem:[%s280 + $0x10] sm:$0xff] %v1026
      %1180 = vst [vmem:[%s280 + $0x18] sm:$0xff] %v1041
      %1181 = vst [vmem:[%s280 + $0x20] sm:$0xff] %v1056
      %1182 = vst [vmem:[%s280 + $0x28] sm:$0xff] %v1071
      %1183 = vst [vmem:[%s280 + $0x30] sm:$0xff] %v1086
      %1184 = vst [vmem:[%s280 + $0x38] sm:$0xff] %v1101
      %1185 = vst [vmem:[%s280 + $0x40] sm:$0xff] %v1116
      %1186 = vst [vmem:[%s280 + $0x48] sm:$0xff] %v1131
      %1187 = vst [vmem:[%s280 + $0x50] sm:$0xff] %v1146
      %1188 = vst [vmem:[%s280 + $0x58] sm:$0xff] %v1161
      %1189 = vst [vmem:[%s280 + $0x60] sm:$0xff] %v1176
      %s1190 = smul.u32 13, %s18
      %p1191 = scmp.lt.s32.totalorder %s1190, 25
      %s1192 = scalar_select %p1191, %s1190, 25
      %s1193 = smul.addr %s1192, 8
      %s1194 = scalar_lea.vmem %s7, %s1193
      // Predicated region
      $region49: #{actor_forward.1} parent=47 // pred_check
        %p1195 = pneg %p188
      $region50: #{actor_forward.1} parent=47 // pred_check_branch
        %1197 = sbr.rel (%p1195) target = $region52
      $region51: #{actor_forward.1} parent=47 // pred_region
        %s1198 = smul.u32 13, %s18
      $region52: #{actor_forward.1} parent=47 // pred_fallthru
        _
    $region48: #{actor_forward.1} parent=5 // pred_fallthru
      _
    %p1199 = scmp.le.s32.totalorder 2, %s13
    // Predicated region
    $region53: #{actor_forward.1} parent=5 // pred_check
      %p1200 = pneg %p1199
    $region54: #{actor_forward.1} parent=5 // pred_check_branch
      %1202 = sbr.rel (%p1200) target = $region56
    $region55: #{actor_forward.1} parent=5 // pred_region
      %s1203 = ssub.s32 %s13, 2
      // Predicated region
      $region57: #{actor_forward.1} parent=55 // pred_check
        %p1204 = pneg %p194
      $region58: #{actor_forward.1} parent=55 // pred_check_branch
        %1206 = sbr.rel (%p1204) target = $region60
      $region59: #{actor_forward.1} parent=55 // pred_region
        %s1207 = smul.u32 13, %s19
        %p1208 = scmp.lt.s32.totalorder %s1207, 25
        %s1209 = scalar_select %p1208, %s1207, 25
        %s1210 = smul.addr %s1209, 8
        %s1211 = scalar_lea.vmem %s7, %s1210
      $region60: #{actor_forward.1} parent=55 // pred_fallthru
        _
    $region56: #{actor_forward.1} parent=5 // pred_fallthru
      _
  $region6: #{actor_forward.1} parent=0 // loop_footer
    %s17 = sadd.s32 1, %s13
  $region7: #{actor_forward.1} parent=0 // loop_footer_branch
    %12 = sbr.rel target = $region3
  $region8: #{actor_forward.1} parent=0 // loop_exit
    _

</llo_original>
